<compile_context>
chip_gen: v5e
topology: v5e:2x2
jax: 0.10.0
libtpu: 0.0.40
codegen_flags: <defaults>
</compile_context>

<pallas_src>
import jax
import jax.numpy as jnp
from jax.experimental import pallas as pl
from jax.experimental.pallas import tpu as pltpu


def layer_mix_kernel(w_ref, h_ref, o_ref, acc_ref):
    """One (batch, time-tile, layer) grid step of the weighted layer mix.

    w_ref:   (L,)            softmax'ed layer weights in SMEM (scalar prefetch)
    h_ref:   (1, 1, T_t, D)  one layer's activation strip for this (b, t) tile
    o_ref:   (1, T_t, D)     mixed output tile (written on the last layer step)
    acc_ref: (T_t, D) f32    VMEM accumulator, persistent across the L axis
    """
    l = pl.program_id(2)

    @pl.when(l == 0)
    def _init():
        acc_ref[...] = jnp.zeros_like(acc_ref)

    wl = w_ref[l]  # scalar from SMEM -> sreg-sourced multiply
    acc_ref[...] += h_ref[0, 0].astype(jnp.float32) * wl

    @pl.when(l == pl.num_programs(2) - 1)
    def _finalize():
        o_ref[0] = acc_ref[...].astype(o_ref.dtype)


def _pick_time_tile(T, D, itemsize, strip_cap_bytes=4 << 20):
    """Largest multiple-of-8 divisor of T whose (T_t, D) strip stays under ~4 MiB.

    With input/output double-buffering plus the f32 accumulator this keeps the
    kernel comfortably inside v7x's 64 MiB physical VMEM (and v5e/v6e a fortiori).
    """
    if T % 8 != 0:
        return T  # full-T block is always a legal block shape
    best = 8
    for t in range(8, T + 1, 8):
        if T % t == 0 and t * D * itemsize <= strip_cap_bytes:
            best = t
    return best


def huggingface_frontend_layer_mix(hidden_states, layer_weights, *, time_tile=None):
    """hidden_states: (B, L, T, D); layer_weights: (L,) -> (B, T+1, D).

    Equivalent to torch.matmul(F.pad(stack(h, dim=3), (0,0,0,0,0,1), 'reflect'),
    softmax(layer_weights)).
    """
    B, L, T, D = hidden_states.shape
    assert T >= 2, "reflect pad of width 1 requires T >= 2"
    assert layer_weights.shape == (L,)

    # Softmax over the L learned weights hoisted out of the kernel (done once, O(L));
    # the normalized weights ride into SMEM via scalar prefetch.
    w = jax.nn.softmax(layer_weights.astype(jnp.float32), axis=0)

    itemsize = hidden_states.dtype.itemsize
    T_t = time_tile if time_tile is not None else _pick_time_tile(T, D, itemsize)
    assert T % T_t == 0 and (T_t % 8 == 0 or T_t == T), "bad time tile"
    n_t = T // T_t

    # VMEM budget: input strip x2 (double buffer) + output strip x2 + f32 accumulator.
    strip = T_t * D
    est = 2 * strip * itemsize + 2 * strip * itemsize + strip * 4
    vmem_limit = int(min(max(2 * est, 16 << 20), 48 << 20))  # fits v7x's 64 MiB physical VMEM

    mixed = pl.pallas_call(
        layer_mix_kernel,
        out_shape=jax.ShapeDtypeStruct((B, T, D), hidden_states.dtype),
        grid_spec=pltpu.PrefetchScalarGridSpec(
            num_scalar_prefetch=1,
            grid=(B, n_t, L),
            in_specs=[
                pl.BlockSpec((1, 1, T_t, D), lambda b, t, l, w_ref: (b, l, t, 0)),
            ],
            out_specs=pl.BlockSpec((1, T_t, D), lambda b, t, l, w_ref: (b, t, 0)),
            scratch_shapes=[pltpu.VMEM((T_t, D), jnp.float32)],
        ),
        compiler_params=pltpu.CompilerParams(
            dimension_semantics=("parallel", "parallel", "arbitrary"),
            vmem_limit_bytes=vmem_limit,
        ),
    )(w, hidden_states)

    # Reflect pad one frame at the end of time (PyTorch 'reflect' excludes the edge -> row T-2),
    # done in the wrapper so the hot store path has no 1-sublane masked stores and the output
    # blocks stay (8,128)-aligned.
    return jnp.concatenate([mixed, mixed[:, T - 2:T - 1, :]], axis=1)


def reference(hidden_states, layer_weights):
    """Pure-JAX mirror of the PyTorch forward (use_last=False)."""
    # torch.stack(hidden_states, dim=3) -> (B, T, D, L)
    h = jnp.transpose(hidden_states, (0, 2, 3, 1))
    # F.pad(h, (0,0,0,0,0,1), mode='reflect') pads dim 1 (time) by 1 at the end
    h = jnp.pad(h, ((0, 0), (0, 1), (0, 0), (0, 0)), mode="reflect")
    w = jax.nn.softmax(layer_weights, axis=0)
    return jnp.matmul(h, w)  # (B, T+1, D)


if __name__ == "__main__":
    # encoder_size=12 -> 13 hidden states; D=128 keeps lanes dense (real HF D=768/1024).
    B, L, T, D = 2, 13, 16, 128

    key = jax.random.PRNGKey(0)
    k_h, _ = jax.random.split(key)
    # TODO(synk): AutoModel.from_pretrained backbone (external pretrained weights) has no Pallas
    # equivalent; its stacked hidden_states are synthesized here as the kernel input.
    hidden_states = jax.random.normal(k_h, (B, L, T, D), dtype=jnp.float32)
    layer_weights = jnp.ones((L,), dtype=jnp.float32)  # torch.ones(13) init

    # f32 path; time_tile=8 exercises the (B, T-tile, L) grid with multiple time tiles.
    out = jax.block_until_ready(
        huggingface_frontend_layer_mix(hidden_states, layer_weights, time_tile=8))
    ref = reference(hidden_states, layer_weights)
    assert out.shape == (B, T + 1, D)
    assert jnp.allclose(out, ref, atol=1e-5, rtol=1e-5), "kernel != reference (f32)"

    # bf16 transfer path (op is HBM-bandwidth bound; halving bytes moved ~2x); f32 accumulation.
    h_bf16 = hidden_states.astype(jnp.bfloat16)
    out_bf = jax.block_until_ready(
        huggingface_frontend_layer_mix(h_bf16, layer_weights, time_tile=8))
    ref_bf = reference(h_bf16.astype(jnp.float32), layer_weights)
    assert out_bf.shape == (B, T + 1, D) and out_bf.dtype == jnp.bfloat16
    assert jnp.allclose(out_bf.astype(jnp.float32), ref_bf, atol=5e-2, rtol=5e-2), \
        "kernel != reference (bf16)"

    print("KERNEL_OK")
</pallas_src>

<mosaic_0001>
module attributes {stable_mosaic.version = 11 : i64} {
  func.func @layer_mix_kernel(%arg0: i32, %arg1: i32, %arg2: i32, %arg3: memref<13xf32, #tpu.memory_space<smem>>, %arg4: memref<1x1x8x128xf32, #tpu.memory_space<vmem>>, %arg5: memref<1x8x128xf32, #tpu.memory_space<vmem>>, %arg6: memref<8x128xf32, #tpu.memory_space<vmem>>) attributes {dimension_semantics = [#tpu.dimension_semantics<parallel>, #tpu.dimension_semantics<parallel>, #tpu.dimension_semantics<arbitrary>], iteration_bounds = array<i64: 2, 2, 13>, scalar_prefetch = 1 : i64, scratch_operands = 1 : i64, tpu.core_type = #tpu.core_type<tc>, window_params = [{transform_indices = @transform_0, window_bounds = array<i64: 1, 1, 8, 128>}, {transform_indices = @transform_1, window_bounds = array<i64: 1, 8, 128>}]} {
    %c0_i32 = arith.constant 0 : i32
    %0 = arith.cmpi eq, %arg2, %c0_i32 : i32
    %1 = arith.extui %0 : i1 to i32
    %c0_i32_0 = arith.constant 0 : i32
    %2 = arith.cmpi ne, %1, %c0_i32_0 : i32
    scf.if %2 {
      %cst = arith.constant 0.000000e+00 : f32
      %15 = vector.broadcast %cst : f32 to vector<8x128xf32>
      %c0_9 = arith.constant 0 : index
      %c0_10 = arith.constant 0 : index
      %16 = vector.load %arg6[%c0_9, %c0_10] : memref<8x128xf32, #tpu.memory_space<vmem>>, vector<8x128xf32>
      tpu.vector_store %arg6[%c0_9, %c0_10], %15 {strides = array<i32>} : memref<8x128xf32, #tpu.memory_space<vmem>>, vector<8x128xf32>,
    } else {
    }
    %3 = arith.index_cast %arg2 : i32 to index
    %4 = memref.load %arg3[%3] : memref<13xf32, #tpu.memory_space<smem>>
    %c0 = arith.constant 0 : index
    %c0_1 = arith.constant 0 : index
    %5 = vector.load %arg6[%c0, %c0_1] : memref<8x128xf32, #tpu.memory_space<vmem>>, vector<8x128xf32>
    %c0_2 = arith.constant 0 : index
    %c0_3 = arith.constant 0 : index
    %c0_4 = arith.constant 0 : index
    %c0_5 = arith.constant 0 : index
    %6 = vector.load %arg4[%c0_2, %c0_3, %c0_4, %c0_5] : memref<1x1x8x128xf32, #tpu.memory_space<vmem>>, vector<1x1x8x128xf32>
    %7 = vector.shape_cast %6 : vector<1x1x8x128xf32> to vector<8x128xf32>
    %8 = vector.broadcast %4 : f32 to vector<8x128xf32>
    %9 = arith.mulf %7, %8 : vector<8x128xf32>
    %10 = arith.addf %5, %9 : vector<8x128xf32>
    %c0_6 = arith.constant 0 : index
    %c0_7 = arith.constant 0 : index
    %11 = vector.load %arg6[%c0_6, %c0_7] : memref<8x128xf32, #tpu.memory_space<vmem>>, vector<8x128xf32>
    tpu.vector_store %arg6[%c0_6, %c0_7], %10 {strides = array<i32>} : memref<8x128xf32, #tpu.memory_space<vmem>>, vector<8x128xf32>,
    %c12_i32 = arith.constant 12 : i32
    %12 = arith.cmpi eq, %arg2, %c12_i32 : i32
    %13 = arith.extui %12 : i1 to i32
    %c0_i32_8 = arith.constant 0 : i32
    %14 = arith.cmpi ne, %13, %c0_i32_8 : i32
    scf.if %14 {
      %c0_9 = arith.constant 0 : index
      %c0_10 = arith.constant 0 : index
      %15 = vector.load %arg6[%c0_9, %c0_10] : memref<8x128xf32, #tpu.memory_space<vmem>>, vector<8x128xf32>
      %c0_11 = arith.constant 0 : index
      %c0_12 = arith.constant 0 : index
      %c0_13 = arith.constant 0 : index
      %16 = vector.load %arg5[%c0_11, %c0_12, %c0_13] : memref<1x8x128xf32, #tpu.memory_space<vmem>>, vector<1x8x128xf32>
      %17 = vector.shape_cast %16 : vector<1x8x128xf32> to vector<8x128xf32>
      %18 = vector.shape_cast %15 : vector<8x128xf32> to vector<1x8x128xf32>
      tpu.vector_store %arg5[%c0_11, %c0_12, %c0_13], %18 {strides = array<i32>} : memref<1x8x128xf32, #tpu.memory_space<vmem>>, vector<1x8x128xf32>,
    } else {
    }
    return
  }
  func.func @transform_0(%arg0: i32, %arg1: i32, %arg2: i32, %arg3: memref<13xf32, #tpu.memory_space<smem>>) -> (i32, i32, i32, i32) {
    %c0_i32 = arith.constant 0 : i32
    %c0_i32_0 = arith.constant 0 : i32
    return %arg0, %arg2, %arg1, %c0_i32 : i32, i32, i32, i32
  }
  func.func @transform_1(%arg0: i32, %arg1: i32, %arg2: i32, %arg3: memref<13xf32, #tpu.memory_space<smem>>) -> (i32, i32, i32) {
    %c0_i32 = arith.constant 0 : i32
    %c0_i32_0 = arith.constant 0 : i32
    return %arg0, %arg1, %c0_i32 : i32, i32, i32
  }
}

</mosaic_0001>

<llo_original>
// kernel: tpu_custom_call.1
$region0: #{tpu_custom_call.1}
  #allocation0 [shape = 'u32[]', space=smem, size = 0x4, offset = 0x4, fixed_abs, tag = 'smem constant byte address 0x4 - core index']
  #allocation1 [shape = 'u32[72,128]{1,0:T(1,128)}', space=vmem, size = 0x9000, scoped, tag = 'internal scratch']
  #allocation2 [shape = 'f32[8,128]{1,0:T(8,128)}', space=vmem, size = 0x1000, scoped, tag = 'scratch operand']
  #allocation3 [shape = 's32[1]{0}', space=sflag, size = 0x4, scoped, tag = 'scoped memory for tpu_custom_call.1']
  #allocation4 [shape = 'u8[512]{0}', space=smem, size = 0x200, scoped, tag = 'prefetched SMEM operand 0']
  %s0 = inlined_call_operand.hbm [shape: f32[13], index: 0, kind: input, shape index: {}]
  %s1 = inlined_call_operand.hbm [shape: f32[2,13,16,128], index: 1, kind: input, shape index: {}]
  %s2 = inlined_call_operand.hbm [shape: f32[2,16,128], index: 2, kind: output, shape index: {}]
  %s3 = sld [smem:[#allocation0]]
  $region49: #{tpu_custom_call.1} parent=0
    _
  %s5 = ssub.s32 1, %s3
  %s6 = scalar_select 0, %s5, %s3
  %s8 = sshll.u32 %s0, 4
  %s9 = int_to_ptr.hbm [resolvable:$true] %s8
  %11 = dma.hbm_to_smem %s9, 16, [#allocation4], [#allocation3]
  %13 = dma.done [#allocation3], 16
  %14 = sfence
  $region1: #{tpu_custom_call.1} parent=0
    #allocation5 [shape = 'u8[8192]{0}', space=vmem, size = 0x2000, scoped, tag = 'input window, operand 1']
    #allocation6 [shape = 's32[2]{0}', space=sflag, size = 0x8, scoped, tag = 'scoped memory for tpu_custom_call.1']
    #allocation7 [shape = 's32[2]{0}', space=sflag, size = 0x8, scoped, tag = 'scoped memory for tpu_custom_call.1']
    #allocation8 [shape = 'u8[8192]{0}', space=vmem, size = 0x2000, scoped, tag = 'output window, operand 0']
    %15 = vsyncpa [#allocation6], 0
    %s16 = scalar_lea.sflag [#allocation6], 1
    %17 = vsyncpa %s16, 0
    %18 = vsyncpa [#allocation7], 0
    %s19 = scalar_lea.sflag [#allocation7], 1
    %20 = vsyncpa %s19, 0
    loop: start=0, step=1, limit=54
    $region2: #{tpu_custom_call.1} parent=1 // loop_pre_header
      _
    $region3: #{tpu_custom_call.1} parent=1 // loop_header
      %s22 = sphi 0, %s26
      %p23 = scmp.ge.s32.totalorder %s22, 54
      %s29 = sphi 0, %s48
      %s30 = sphi 0, %s44
      %s31 = sphi 0, %s40
      %s32 = sphi 0, %s29
      %s33 = sphi 0, %s30
      %s34 = sphi 0, %s31
      %s35 = sphi 0, %s32
      %s36 = sphi 0, %s33
      %s37 = sphi 0, %s34
      %s55 = sphi 0, %s57
      %s58 = sphi 0, %s55
      %s59 = sphi 0, %s58
      %s75 = sphi 0, %s59
      %s83 = sphi 0, %s85
      %s86 = sphi 0, %s83
      %s87 = sphi 0, %s86
      %s103 = sphi 0, %s87
    $region4: #{tpu_custom_call.1} parent=1 // loop_header_branch
      %25 = sbr.rel (%p23) target = $region8
    $region5: #{tpu_custom_call.1} parent=1 // loop_body
      %s27 = ssub.s32 %s22, 1
      %s28 = ssub.s32 %s22, 2
      %s38 = sadd.s32 1, %s31
      %p39 = scmp.ge.s32.totalorder %s38, 13
      %s40 = scalar_select %p39, 0, %s38
      %s41 = sadd.s32 1, %s30
      %s42 = scalar_select %p39, %s41, %s30
      %p43 = scmp.ge.s32.totalorder %s42, 2
      %s44 = scalar_select %p43, 0, %s42
      %s45 = sadd.s32 1, %s29
      %s46 = scalar_select %p43, %s45, %s29
      %p47 = scmp.ge.s32.totalorder %s46, 2
      %s48 = scalar_select %p47, 0, %s46
      %s49 = ssub.s32 %s29, %s48
      %s50 = ssub.s32 %s31, %s40
      %s51 = sor.u32 %s49, %s50
      %s52 = ssub.s32 %s30, %s44
      %s53 = sor.u32 %s51, %s52
      %p54 = scmp.eq.s32.totalorder %s53, 0
      %s56 = sadd.s32 %s55, 1
      %s57 = scalar_select %p54, %s55, %s56
      %p60 = pneg %p54
      %p61 = scmp.eq.s32.totalorder %s22, 51
      %p62 = por %p60, %p61
      %p63 = scmp.ne.s32.totalorder %s55, %s58
      %p64 = scmp.eq.s32.totalorder %s22, 0
      %p65 = por %p63, %p64
      %p66 = scmp.ne.s32.totalorder %s55, %s58
      %p67 = scmp.eq.s32.totalorder %s27, 51
      %p68 = por %p66, %p67
      %p69 = scmp.ne.s32.totalorder %s58, %s59
      %p70 = scmp.eq.s32.totalorder %s27, 0
      %p71 = por %p69, %p70
      %p72 = scmp.ne.s32.totalorder %s58, %s59
      %p73 = scmp.eq.s32.totalorder %s28, 51
      %p74 = por %p72, %p73
      %p76 = scmp.ne.s32.totalorder %s59, %s75
      %p77 = scmp.eq.s32.totalorder %s28, 0
      %p78 = por %p76, %p77
      %s79 = ssub.s32 %s29, %s48
      %s80 = ssub.s32 %s30, %s44
      %s81 = sor.u32 %s79, %s80
      %p82 = scmp.eq.s32.totalorder %s81, 0
      %s84 = sadd.s32 %s83, 1
      %s85 = scalar_select %p82, %s83, %s84
      %p88 = pneg %p82
      %p89 = scmp.eq.s32.totalorder %s22, 51
      %p90 = por %p88, %p89
      %p91 = scmp.ne.s32.totalorder %s83, %s86
      %p92 = scmp.eq.s32.totalorder %s22, 0
      %p93 = por %p91, %p92
      %p94 = scmp.ne.s32.totalorder %s83, %s86
      %p95 = scmp.eq.s32.totalorder %s27, 51
      %p96 = por %p94, %p95
      %p97 = scmp.ne.s32.totalorder %s86, %s87
      %p98 = scmp.eq.s32.totalorder %s27, 0
      %p99 = por %p97, %p98
      %p100 = scmp.ne.s32.totalorder %s86, %s87
      %p101 = scmp.eq.s32.totalorder %s28, 51
      %p102 = por %p100, %p101
      %p104 = scmp.ne.s32.totalorder %s87, %s103
      %p105 = scmp.eq.s32.totalorder %s28, 0
      %p106 = por %p104, %p105
      %p107 = scmp.le.s32.totalorder 1, %s22
      %p108 = scmp.lt.s32.totalorder %s22, 53
      %p109 = pnand %p107, %p108
      %p110 = pneg %p109
      // Predicated region
      $region9: #{tpu_custom_call.1} parent=5 // pred_check
        _
      $region10: #{tpu_custom_call.1} parent=5 // pred_check_branch
        %112 = sbr.rel (%p109) target = $region12
      $region11: #{tpu_custom_call.1} parent=5 // pred_region
        %s113 = ssub.s32 %s22, 1
      $region12: #{tpu_custom_call.1} parent=5 // pred_fallthru
        _
      %p114 = scmp.lt.s32.totalorder %s22, 52
      // Predicated region
      $region13: #{tpu_custom_call.1} parent=5 // pred_check
        %p115 = pneg %p114
      $region14: #{tpu_custom_call.1} parent=5 // pred_check_branch
        %117 = sbr.rel (%p115) target = $region16
      $region15: #{tpu_custom_call.1} parent=5 // pred_region
        // Predicated region
        $region17: #{tpu_custom_call.1} parent=15 // pred_check
          %p118 = pneg %p65
        $region18: #{tpu_custom_call.1} parent=15 // pred_check_branch
          %120 = sbr.rel (%p118) target = $region20
        $region19: #{tpu_custom_call.1} parent=15 // pred_region
          %s121 = sand.u32 %s55, 1
          %s122 = scalar_lea.sflag [#allocation6], %s121
          %s123 = sand.u32 %s55, 1
          %s124 = smul.addr %s123, 8
          %s125 = scalar_lea.vmem [#allocation5], %s124
          %127 = vsyncadd %s122, 0
          %s128 = smul.addr %s31, 2
          %s129 = sadd.s32 %s30, %s128
          %s130 = smul.addr %s29, 26
          %s131 = sadd.s32 %s129, %s130
          %s132 = smul.addr %s131, 8
          %s133 = scalar_lea.hbm %s1, %s132
          %s135 = sshll.u32 %s133, 4
          %s136 = int_to_ptr.hbm [resolvable:$true] %s135
          %s137 = sshll.u32 %s125, 4
          %s138 = int_to_ptr.vmem [resolvable:$true] %s137
          %140 = dma.hbm_to_vmem [thread:$0]  %s136, 128, %s138, %s122
        $region20: #{tpu_custom_call.1} parent=15 // pred_fallthru
          _
      $region16: #{tpu_custom_call.1} parent=5 // pred_fallthru
        _
      %p141 = scmp.le.s32.totalorder 1, %s22
      %p142 = scmp.lt.s32.totalorder %s22, 53
      %p143 = pnand %p141, %p142
      %p144 = pneg %p143
      // Predicated region
      $region21: #{tpu_custom_call.1} parent=5 // pred_check
        _
      $region22: #{tpu_custom_call.1} parent=5 // pred_check_branch
        %146 = sbr.rel (%p143) target = $region24
      $region23: #{tpu_custom_call.1} parent=5 // pred_region
        %s147 = ssub.s32 %s22, 1
        %s148 = sand.u32 %s58, 1
        %s149 = scalar_lea.sflag [#allocation6], %s148
        %s150 = sand.u32 %s58, 1
        %s151 = smul.addr %s150, 8
        %s152 = scalar_lea.vmem [#allocation5], %s151
        // Predicated region
        $region25: #{tpu_custom_call.1} parent=23 // pred_check
          %p153 = pneg %p71
        $region26: #{tpu_custom_call.1} parent=23 // pred_check_branch
          %155 = sbr.rel (%p153) target = $region28
        $region27: #{tpu_custom_call.1} parent=23 // pred_region
          %157 = dma.done %s149, 128
        $region28: #{tpu_custom_call.1} parent=23 // pred_fallthru
          _
        %s158 = sand.u32 %s58, 1
        %s159 = scalar_lea.sflag [#allocation6], %s158
        %s160 = sand.u32 %s58, 1
        %s161 = smul.addr %s160, 8
        %s162 = scalar_lea.vmem [#allocation5], %s161
        %p163 = pneg %p71
        %p164 = pneg %p68
        %p165 = pneg %p99
        %p166 = pneg %p96
        %s167 = sand.u32 %s86, 1
        %s168 = scalar_lea.sflag [#allocation7], %s167
        %s169 = sand.u32 %s86, 1
        %s170 = smul.addr %s169, 8
        %s171 = scalar_lea.vmem [#allocation8], %s170
        %p172 = scmp.eq.s32.totalorder %s34, 0
        // Predicated region
        $region29: #{tpu_custom_call.1} parent=23 // pred_check
          %p173 = pneg %p172
        $region30: #{tpu_custom_call.1} parent=23 // pred_check_branch
          %175 = sbr.rel (%p173) target = $region32
        $region31: #{tpu_custom_call.1} parent=23 // pred_region
          %176 = vst [vmem:[#allocation2] sm:$0xff] 0.0
        $region32: #{tpu_custom_call.1} parent=23 // pred_fallthru
          _
        %s177 = sld [smem:[#allocation4 + %s34]]
        %v178 = vld [vmem:[#allocation2] sm:$0xff]
        %v179 = vld [vmem:[%s152] sm:$0xff]
        %v180 = vstv %s177
        %v181 = vmul.f32 %v179, %v180
        %v182 = vadd.f32 %v178, %v181
        %183 = vst [vmem:[#allocation2] sm:$0xff] %v182
        %p184 = scmp.eq.s32.totalorder %s34, 12
        // Predicated region
        $region33: #{tpu_custom_call.1} parent=23 // pred_check
          %p185 = pneg %p184
        $region34: #{tpu_custom_call.1} parent=23 // pred_check_branch
          %187 = sbr.rel (%p185) target = $region36
        $region35: #{tpu_custom_call.1} parent=23 // pred_region
          %v188 = vld [vmem:[#allocation2] sm:$0xff]
          %189 = vst [vmem:[%s171] sm:$0xff] %v188
        $region36: #{tpu_custom_call.1} parent=23 // pred_fallthru
          _
        %s190 = sand.u32 %s86, 1
        %s191 = scalar_lea.sflag [#allocation7], %s190
        %s192 = sand.u32 %s86, 1
        %s193 = smul.addr %s192, 8
        %s194 = scalar_lea.vmem [#allocation8], %s193
        // Predicated region
        $region37: #{tpu_custom_call.1} parent=23 // pred_check
          %p195 = pneg %p96
        $region38: #{tpu_custom_call.1} parent=23 // pred_check_branch
          %197 = sbr.rel (%p195) target = $region40
        $region39: #{tpu_custom_call.1} parent=23 // pred_region
          %199 = vsyncadd %s191, 0
          %s200 = smul.addr %s32, 2
          %s201 = sadd.s32 %s33, %s200
          %s202 = smul.addr %s201, 8
          %s203 = scalar_lea.hbm %s2, %s202
          %s205 = sshll.u32 %s194, 4
          %s206 = int_to_ptr.vmem [resolvable:$true] %s205
          %s207 = sshll.u32 %s203, 4
          %s208 = int_to_ptr.hbm [resolvable:$true] %s207
          %210 = dma.vmem_to_hbm [thread:$0]  %s206, 128, %s208, %s191
        $region40: #{tpu_custom_call.1} parent=23 // pred_fallthru
          _
      $region24: #{tpu_custom_call.1} parent=5 // pred_fallthru
        _
      %p211 = scmp.le.s32.totalorder 2, %s22
      // Predicated region
      $region41: #{tpu_custom_call.1} parent=5 // pred_check
        %p212 = pneg %p211
      $region42: #{tpu_custom_call.1} parent=5 // pred_check_branch
        %214 = sbr.rel (%p212) target = $region44
      $region43: #{tpu_custom_call.1} parent=5 // pred_region
        %s215 = ssub.s32 %s22, 2
        // Predicated region
        $region45: #{tpu_custom_call.1} parent=43 // pred_check
          %p216 = pneg %p102
        $region46: #{tpu_custom_call.1} parent=43 // pred_check_branch
          %218 = sbr.rel (%p216) target = $region48
        $region47: #{tpu_custom_call.1} parent=43 // pred_region
          %s219 = sand.u32 %s87, 1
          %s220 = scalar_lea.sflag [#allocation7], %s219
          %s221 = sand.u32 %s87, 1
          %s222 = smul.addr %s221, 8
          %s223 = scalar_lea.vmem [#allocation8], %s222
          %225 = dma.done %s220, 128
        $region48: #{tpu_custom_call.1} parent=43 // pred_fallthru
          _
      $region44: #{tpu_custom_call.1} parent=5 // pred_fallthru
        _
    $region6: #{tpu_custom_call.1} parent=1 // loop_footer
      %s26 = sadd.s32 1, %s22
    $region7: #{tpu_custom_call.1} parent=1 // loop_footer_branch
      %21 = sbr.rel target = $region3
    $region8: #{tpu_custom_call.1} parent=1 // loop_exit
      _
    %226 = vsyncpa [#allocation6], 1
    %s227 = scalar_lea.sflag [#allocation6], 1
    %228 = vsyncpa %s227, 1
    %229 = vsyncpa [#allocation7], 1
    %s230 = scalar_lea.sflag [#allocation7], 1
    %231 = vsyncpa %s230, 1

</llo_original>
